<compile_context>
chip_gen: v6e
topology: v6e:2x2x1
jax: 0.10.0
libtpu: 0.0.40
codegen_flags: <defaults>
</compile_context>

<pallas_src>
import jax
import jax.numpy as jnp
from jax.experimental import pallas as pl
from jax.experimental.pallas import tpu as pltpu

_SQRT_2_OVER_PI = 0.7978845608028654  # sqrt(2/pi)


def _round_up(a, b):
    return ((a + b - 1) // b) * b


def _gelu_tanh_f32(x):
    # GELU (tanh approximation), matching the PyTorch reference, in f32.
    return 0.5 * x * (1.0 + jnp.tanh(_SQRT_2_OVER_PI * (x + 0.044715 * x * x * x)))


# --------------------------------- kernel ------------------------------------

def ffn_kernel(x_ref, w1_ref, b1_ref, w2_ref, b2_ref, out_ref, acc_ref):
    # x:(bm,Dp) f32 | w1:(Dp,bh) bf16 | b1:(1,bh) f32 | w2:(bh,Dp) bf16 | b2:(1,Dp) f32
    # acc:(bm,Dp) f32 scratch, persistent across the H (reduction, last) grid axis.
    k = pl.program_id(1)

    @pl.when(k == 0)
    def _():
        acc_ref[...] = jnp.zeros_like(acc_ref)

    # MXU is bf16-native on v5e/v6e/v7x: feed bf16 operands, accumulate in f32.
    x = x_ref[...].astype(jnp.bfloat16)
    h = jnp.dot(x, w1_ref[...], preferred_element_type=jnp.float32)
    h = h + b1_ref[...]                      # bias add in f32
    h = _gelu_tanh_f32(h)                    # GELU in f32 (tanh rides the EUP slot)
    acc_ref[...] += jnp.dot(h.astype(jnp.bfloat16), w2_ref[...],
                            preferred_element_type=jnp.float32)

    @pl.when(k == pl.num_programs(1) - 1)
    def _():
        out_ref[...] = (acc_ref[...] + b2_ref[...]).astype(out_ref.dtype)


# -------------------------------- wrapper -------------------------------------

def feed_forward(x, w1, b1, w2, b2, *, block_rows=None, block_h=None):
    """Fused FeedForward. x: (..., D); w1: (D, H); b1: (H,); w2: (H, D); b2: (D,)."""
    orig_dtype = x.dtype
    D = x.shape[-1]
    H = w1.shape[1]
    lead = x.shape[:-1]

    x2 = x.reshape(-1, D)          # flatten leading dims into one dense row axis
    n = x2.shape[0]

    # ---- lane-dense feature dims (multiples of 128).  Real GPT dims (768/1024/
    # 3072/4096) are already aligned -> no-op; only the toy config pays a tiny
    # pad.  Zero-padded rows/cols contribute nothing, so results are exact.
    Dp = _round_up(D, 128)
    Hp = _round_up(H, 128)
    if Dp != D:
        x2 = jnp.pad(x2, ((0, 0), (0, Dp - D)))
    if (Dp, Hp) != (D, H):
        w1 = jnp.pad(w1, ((0, Dp - D), (0, Hp - H)))
        b1 = jnp.pad(b1, ((0, Hp - H),))
        w2 = jnp.pad(w2, ((0, Hp - H), (0, Dp - D)))
        b2 = jnp.pad(b2, ((0, Dp - D),))

    # ---- row tiling: big tiles amortize the ~0.35us grid-step cost.
    # 512 is a multiple of both 128 (v5e MXU) and 256 (v6e/v7x MXU).
    if block_rows is None:
        block_rows = min(_round_up(n, 8), 512)
    block_rows = _round_up(block_rows, 8)
    n_pad = _round_up(n, block_rows)
    if n_pad != n:
        # Tail-only padding; a no-op whenever block_rows divides B*T (common case).
        x2 = jnp.pad(x2, ((0, n_pad - n), (0, 0)))

    # ---- hidden (reduction) chunking: stream W1/W2 in H-chunks instead of
    # holding them fully resident; pick the largest 128-multiple <= 512 dividing H.
    if block_h is None:
        block_h = Hp
        for c in (512, 384, 256, 128):
            if Hp % c == 0:
                block_h = c
                break

    w1b = w1.astype(jnp.bfloat16)                 # halve weight DMA + VMEM bytes
    w2b = w2.astype(jnp.bfloat16)
    b1_2 = b1.reshape(1, Hp).astype(jnp.float32)
    b2_2 = b2.reshape(1, Dp).astype(jnp.float32)

    grid = (n_pad // block_rows, Hp // block_h)   # reduction axis last

    out = pl.pallas_call(
        ffn_kernel,
        out_shape=jax.ShapeDtypeStruct((n_pad, Dp), orig_dtype),
        grid=grid,
        in_specs=[
            pl.BlockSpec((block_rows, Dp), lambda i, k: (i, 0)),   # x row tile (resident over k)
            pl.BlockSpec((Dp, block_h),    lambda i, k: (0, k)),   # W1 H-chunk (bf16)
            pl.BlockSpec((1, block_h),     lambda i, k: (0, k)),   # b1 chunk
            pl.BlockSpec((block_h, Dp),    lambda i, k: (k, 0)),   # W2 H-chunk (bf16)
            pl.BlockSpec((1, Dp),          lambda i, k: (0, 0)),   # b2 (constant)
        ],
        out_specs=pl.BlockSpec((block_rows, Dp), lambda i, k: (i, 0)),
        scratch_shapes=[pltpu.VMEM((block_rows, Dp), jnp.float32)],  # f32 accumulator
        compiler_params=pltpu.CompilerParams(
            # Row tiles independent -> parallel (v7x 2-TC split); H axis is the
            # reduction -> arbitrary.  If xprof shows one v7x TC idle, switch the
            # row axis to pltpu.CORE_PARALLEL.
            dimension_semantics=("parallel", "arbitrary"),
            # Explicit budget: > v5e's 16 MiB default scope, < v7x's 64 MiB
            # physical; actual footprint ~12 MiB at GPT-2 sizes (block_rows=512).
            vmem_limit_bytes=48 * 1024 * 1024,
        ),
    )(x2, w1b, b1_2, w2b, b2_2)

    if n_pad != n or Dp != D:
        out = out[:n, :D]
    return out.reshape(*lead, D)


# ---------------------------- pure-JAX reference -------------------------------

def ref_feed_forward(x, w1, b1, w2, b2):
    h = x @ w1 + b1
    h = 0.5 * h * (1.0 + jnp.tanh(jnp.sqrt(2.0 / jnp.pi) * (h + 0.044715 * h ** 3)))
    return h @ w2 + b2


# ----------------------------------- main --------------------------------------

if __name__ == "__main__":
    cfg = dict(emb_dim=32)
    B, T, D = 2, 8, cfg["emb_dim"]
    Hd = 4 * D

    k0, k1, k2, k3, k4 = jax.random.split(jax.random.PRNGKey(0), 5)
    x = jax.random.normal(k0, (B, T, D), dtype=jnp.float32)
    w1 = 0.02 * jax.random.normal(k1, (D, Hd), dtype=jnp.float32)   # (in, out)
    b1 = 0.02 * jax.random.normal(k2, (Hd,), dtype=jnp.float32)
    w2 = 0.02 * jax.random.normal(k3, (Hd, D), dtype=jnp.float32)   # (in, out)
    b2 = 0.02 * jax.random.normal(k4, (D,), dtype=jnp.float32)

    y = feed_forward(x, w1, b1, w2, b2)
    y = jax.block_until_ready(y)

    ref = ref_feed_forward(x, w1, b1, w2, b2)
    assert y.shape == (B, T, D)
    max_err = float(jnp.max(jnp.abs(y - ref)))
    # bf16 MXU operands (f32 accumulate) vs. pure-f32 reference: bf16-level tol.
    assert max_err < 1e-2, max_err

    print("KERNEL_OK")
</pallas_src>

<mosaic_0001>
module attributes {stable_mosaic.version = 11 : i64} {
  func.func @ffn_kernel(%arg0: i32, %arg1: i32, %arg2: memref<16x128xf32, #tpu.memory_space<vmem>>, %arg3: memref<128x128xbf16, #tpu.memory_space<vmem>>, %arg4: memref<1x128xf32, #tpu.memory_space<vmem>>, %arg5: memref<128x128xbf16, #tpu.memory_space<vmem>>, %arg6: memref<1x128xf32, #tpu.memory_space<vmem>>, %arg7: memref<16x128xf32, #tpu.memory_space<vmem>>, %arg8: memref<16x128xf32, #tpu.memory_space<vmem>>) attributes {dimension_semantics = [#tpu.dimension_semantics<parallel>, #tpu.dimension_semantics<arbitrary>], iteration_bounds = array<i64: 1, 1>, scalar_prefetch = 0 : i64, scratch_operands = 1 : i64, tpu.core_type = #tpu.core_type<tc>, window_params = [{transform_indices = @transform_0, window_bounds = array<i64: 16, 128>}, {transform_indices = @transform_1, window_bounds = array<i64: 128, 128>}, {transform_indices = @transform_2, window_bounds = array<i64: 1, 128>}, {transform_indices = @transform_3, window_bounds = array<i64: 128, 128>}, {pipeline_mode = #tpu.pipeline_mode<synchronous>, transform_indices = @transform_4, window_bounds = array<i64: 1, 128>}, {transform_indices = @transform_5, window_bounds = array<i64: 16, 128>}]} {
    %c0_i32 = arith.constant 0 : i32
    %0 = arith.cmpi eq, %arg1, %c0_i32 : i32
    %1 = arith.extui %0 : i1 to i32
    %c0_i32_0 = arith.constant 0 : i32
    %2 = arith.cmpi ne, %1, %c0_i32_0 : i32
    scf.if %2 {
      %cst_19 = arith.constant 0.000000e+00 : f32
      %32 = vector.broadcast %cst_19 : f32 to vector<16x128xf32>
      %c0_20 = arith.constant 0 : index
      %c0_21 = arith.constant 0 : index
      %33 = vector.load %arg8[%c0_20, %c0_21] : memref<16x128xf32, #tpu.memory_space<vmem>>, vector<16x128xf32>
      tpu.vector_store %arg8[%c0_20, %c0_21], %32 {strides = array<i32>} : memref<16x128xf32, #tpu.memory_space<vmem>>, vector<16x128xf32>,
    } else {
    }
    %c0 = arith.constant 0 : index
    %c0_1 = arith.constant 0 : index
    %3 = vector.load %arg2[%c0, %c0_1] : memref<16x128xf32, #tpu.memory_space<vmem>>, vector<16x128xf32>
    %4 = arith.truncf %3 : vector<16x128xf32> to vector<16x128xbf16>
    %c0_2 = arith.constant 0 : index
    %c0_3 = arith.constant 0 : index
    %5 = vector.load %arg3[%c0_2, %c0_3] : memref<128x128xbf16, #tpu.memory_space<vmem>>, vector<128x128xbf16>
    %cst = arith.constant dense<0.000000e+00> : vector<16x128xf32>
    %6 = tpu.matmul %4, %5, %cst {dimension_numbers = #tpu.dot_dimension_numbers<[1], [0], [0], [1], [0, 0, 1, 1], [], []>} : vector<16x128xbf16>, vector<128x128xbf16>, vector<16x128xf32> -> vector<16x128xf32>
    %c0_4 = arith.constant 0 : index
    %c0_5 = arith.constant 0 : index
    %7 = vector.load %arg4[%c0_4, %c0_5] : memref<1x128xf32, #tpu.memory_space<vmem>>, vector<1x128xf32>
    %8 = vector.broadcast %7 : vector<1x128xf32> to vector<16x128xf32>
    %9 = arith.addf %6, %8 : vector<16x128xf32>
    %cst_6 = arith.constant 5.000000e-01 : f32
    %10 = vector.broadcast %cst_6 : f32 to vector<16x128xf32>
    %11 = arith.mulf %10, %9 : vector<16x128xf32>
    %cst_7 = arith.constant 4.471500e-02 : f32
    %12 = vector.broadcast %cst_7 : f32 to vector<16x128xf32>
    %13 = arith.mulf %12, %9 : vector<16x128xf32>
    %14 = arith.mulf %13, %9 : vector<16x128xf32>
    %15 = arith.mulf %14, %9 : vector<16x128xf32>
    %16 = arith.addf %9, %15 : vector<16x128xf32>
    %cst_8 = arith.constant 0.797884583 : f32
    %17 = vector.broadcast %cst_8 : f32 to vector<16x128xf32>
    %18 = arith.mulf %17, %16 : vector<16x128xf32>
    %19 = math.tanh %18 : vector<16x128xf32>
    %cst_9 = arith.constant 1.000000e+00 : f32
    %20 = vector.broadcast %cst_9 : f32 to vector<16x128xf32>
    %21 = arith.addf %20, %19 : vector<16x128xf32>
    %22 = arith.mulf %11, %21 : vector<16x128xf32>
    %c0_10 = arith.constant 0 : index
    %c0_11 = arith.constant 0 : index
    %23 = vector.load %arg8[%c0_10, %c0_11] : memref<16x128xf32, #tpu.memory_space<vmem>>, vector<16x128xf32>
    %24 = arith.truncf %22 : vector<16x128xf32> to vector<16x128xbf16>
    %c0_12 = arith.constant 0 : index
    %c0_13 = arith.constant 0 : index
    %25 = vector.load %arg5[%c0_12, %c0_13] : memref<128x128xbf16, #tpu.memory_space<vmem>>, vector<128x128xbf16>
    %cst_14 = arith.constant dense<0.000000e+00> : vector<16x128xf32>
    %26 = tpu.matmul %24, %25, %cst_14 {dimension_numbers = #tpu.dot_dimension_numbers<[1], [0], [0], [1], [0, 0, 1, 1], [], []>} : vector<16x128xbf16>, vector<128x128xbf16>, vector<16x128xf32> -> vector<16x128xf32>
    %27 = arith.addf %23, %26 : vector<16x128xf32>
    %c0_15 = arith.constant 0 : index
    %c0_16 = arith.constant 0 : index
    %28 = vector.load %arg8[%c0_15, %c0_16] : memref<16x128xf32, #tpu.memory_space<vmem>>, vector<16x128xf32>
    tpu.vector_store %arg8[%c0_15, %c0_16], %27 {strides = array<i32>} : memref<16x128xf32, #tpu.memory_space<vmem>>, vector<16x128xf32>,
    %c0_i32_17 = arith.constant 0 : i32
    %29 = arith.cmpi eq, %arg1, %c0_i32_17 : i32
    %30 = arith.extui %29 : i1 to i32
    %c0_i32_18 = arith.constant 0 : i32
    %31 = arith.cmpi ne, %30, %c0_i32_18 : i32
    scf.if %31 {
      %c0_19 = arith.constant 0 : index
      %c0_20 = arith.constant 0 : index
      %32 = vector.load %arg8[%c0_19, %c0_20] : memref<16x128xf32, #tpu.memory_space<vmem>>, vector<16x128xf32>
      %c0_21 = arith.constant 0 : index
      %c0_22 = arith.constant 0 : index
      %33 = vector.load %arg6[%c0_21, %c0_22] : memref<1x128xf32, #tpu.memory_space<vmem>>, vector<1x128xf32>
      %34 = vector.broadcast %33 : vector<1x128xf32> to vector<16x128xf32>
      %35 = arith.addf %32, %34 : vector<16x128xf32>
      %c0_23 = arith.constant 0 : index
      %c0_24 = arith.constant 0 : index
      %36 = vector.load %arg7[%c0_23, %c0_24] : memref<16x128xf32, #tpu.memory_space<vmem>>, vector<16x128xf32>
      tpu.vector_store %arg7[%c0_23, %c0_24], %35 {strides = array<i32>} : memref<16x128xf32, #tpu.memory_space<vmem>>, vector<16x128xf32>,
    } else {
    }
    return
  }
  func.func @transform_0(%arg0: i32, %arg1: i32) -> (i32, i32) {
    %c0_i32 = arith.constant 0 : i32
    %c0_i32_0 = arith.constant 0 : i32
    return %arg0, %c0_i32 : i32, i32
  }
  func.func @transform_1(%arg0: i32, %arg1: i32) -> (i32, i32) {
    %c0_i32 = arith.constant 0 : i32
    %c0_i32_0 = arith.constant 0 : i32
    return %c0_i32, %arg1 : i32, i32
  }
  func.func @transform_2(%arg0: i32, %arg1: i32) -> (i32, i32) {
    %c0_i32 = arith.constant 0 : i32
    %c0_i32_0 = arith.constant 0 : i32
    return %c0_i32, %arg1 : i32, i32
  }
  func.func @transform_3(%arg0: i32, %arg1: i32) -> (i32, i32) {
    %c0_i32 = arith.constant 0 : i32
    %c0_i32_0 = arith.constant 0 : i32
    return %arg1, %c0_i32 : i32, i32
  }
  func.func @transform_4(%arg0: i32, %arg1: i32) -> (i32, i32) {
    %c0_i32 = arith.constant 0 : i32
    %c0_i32_0 = arith.constant 0 : i32
    %c0_i32_1 = arith.constant 0 : i32
    return %c0_i32, %c0_i32_0 : i32, i32
  }
  func.func @transform_5(%arg0: i32, %arg1: i32) -> (i32, i32) {
    %c0_i32 = arith.constant 0 : i32
    %c0_i32_0 = arith.constant 0 : i32
    return %arg0, %c0_i32 : i32, i32
  }
}

</mosaic_0001>

<llo_original>
// kernel: tpu_custom_call.1
$region0: #{tpu_custom_call.1}
  #allocation0 [shape = 'u32[]', space=smem, size = 0x4, offset = 0x4, fixed_abs, tag = 'smem constant byte address 0x4 - core index']
  #allocation1 [shape = 'u32[144,128]{1,0:T(1,128)}', space=vmem, size = 0x12000, scoped, tag = 'internal scratch']
  #allocation2 [shape = 'f32[16,128]{1,0:T(8,128)}', space=vmem, size = 0x2000, scoped, tag = 'scratch operand']
  %s0 = inlined_call_operand.hbm [shape: f32[16,128], index: 0, kind: input, shape index: {}]
  %s1 = inlined_call_operand.hbm [shape: bf16[128,128], index: 1, kind: input, shape index: {}]
  %s2 = inlined_call_operand.vmem [shape: f32[1,128], index: 2, kind: input, shape index: {}]
  %s3 = inlined_call_operand.hbm [shape: bf16[128,128], index: 3, kind: input, shape index: {}]
  %s4 = inlined_call_operand.vmem [shape: f32[1,128], index: 4, kind: input, shape index: {}]
  %s5 = inlined_call_operand.hbm [shape: f32[16,128], index: 5, kind: output, shape index: {}]
  %s6 = sld [smem:[#allocation0]]
  $region50: #{tpu_custom_call.1} parent=0
    _
  %s8 = ssub.s32 1, %s6
  %s9 = scalar_select 0, %s8, %s6
  $region1: #{tpu_custom_call.1} parent=0
    #allocation3 [shape = 'u8[8192]{0}', space=vmem, size = 0x2000, scoped, tag = 'input window, operand 0, single buffered']
    #allocation4 [shape = 's32[1]{0}', space=sflag, size = 0x4, scoped, tag = 'scoped memory for tpu_custom_call.1']
    #allocation5 [shape = 's32[1]{0}', space=sflag, size = 0x4, scoped, tag = 'scoped memory for tpu_custom_call.1']
    #allocation6 [shape = 'u8[32768]{0}', space=vmem, size = 0x8000, scoped, tag = 'input window, operand 1, single buffered']
    #allocation7 [shape = 's32[1]{0}', space=sflag, size = 0x4, scoped, tag = 'scoped memory for tpu_custom_call.1']
    #allocation8 [shape = 'u8[32768]{0}', space=vmem, size = 0x8000, scoped, tag = 'input window, operand 3, single buffered']
    #allocation9 [shape = 'u8[8192]{0}', space=vmem, size = 0x2000, scoped, tag = 'output window, operand 0, single buffered']
    %10 = vsyncpa [#allocation4], 0
    %11 = vsyncpa [#allocation7], 0
    %12 = vsyncpa [#allocation5], 0
    // Predicated region
    $region2: #{tpu_custom_call.1} parent=1 // pred_check
      _
    $region3: #{tpu_custom_call.1} parent=1 // pred_check_branch
      %14 = sbr.rel (0) target = $region5
    $region4: #{tpu_custom_call.1} parent=1 // pred_region
      %s16 = ssub.s32 256, 256
      %17 = vsyncadd [#allocation4], %s16
      %s18 = sshll.u32 [#allocation3], 4
      %s19 = int_to_ptr.vmem [resolvable:$true] %s18
      %24 = dma.hbm_to_vmem [thread:$0]  %s0, 256, %s19, [#allocation4], 128, 128, 8
    $region5: #{tpu_custom_call.1} parent=1 // pred_fallthru
      _
    // Predicated region
    $region6: #{tpu_custom_call.1} parent=1 // pred_check
      _
    $region7: #{tpu_custom_call.1} parent=1 // pred_check_branch
      %26 = sbr.rel (0) target = $region9
    $region8: #{tpu_custom_call.1} parent=1 // pred_region
      %s28 = ssub.s32 1024, 1024
      %29 = vsyncadd [#allocation7], %s28
      %s30 = sshll.u32 [#allocation6], 4
      %s31 = int_to_ptr.vmem [resolvable:$true] %s30
      %36 = dma.hbm_to_vmem [thread:$0]  %s1, 1024, %s31, [#allocation7], 64, 64, 4
    $region9: #{tpu_custom_call.1} parent=1 // pred_fallthru
      _
    // Predicated region
    $region10: #{tpu_custom_call.1} parent=1 // pred_check
      _
    $region11: #{tpu_custom_call.1} parent=1 // pred_check_branch
      %38 = sbr.rel (0) target = $region13
    $region12: #{tpu_custom_call.1} parent=1 // pred_region
      _
    $region13: #{tpu_custom_call.1} parent=1 // pred_fallthru
      _
    // Predicated region
    $region14: #{tpu_custom_call.1} parent=1 // pred_check
      _
    $region15: #{tpu_custom_call.1} parent=1 // pred_check_branch
      %40 = sbr.rel (0) target = $region17
    $region16: #{tpu_custom_call.1} parent=1 // pred_region
      %s42 = ssub.s32 1024, 1024
      %43 = vsyncadd [#allocation7], %s42
      %s44 = sshll.u32 [#allocation8], 4
      %s45 = int_to_ptr.vmem [resolvable:$true] %s44
      %50 = dma.hbm_to_vmem [thread:$0]  %s3, 1024, %s45, [#allocation7], 64, 64, 4
    $region17: #{tpu_custom_call.1} parent=1 // pred_fallthru
      _
    // Predicated region
    $region18: #{tpu_custom_call.1} parent=1 // pred_check
      _
    $region19: #{tpu_custom_call.1} parent=1 // pred_check_branch
      %52 = sbr.rel (0) target = $region21
    $region20: #{tpu_custom_call.1} parent=1 // pred_region
      _
    $region21: #{tpu_custom_call.1} parent=1 // pred_fallthru
      _
    // Predicated region
    $region22: #{tpu_custom_call.1} parent=1 // pred_check
      _
    $region23: #{tpu_custom_call.1} parent=1 // pred_check_branch
      %54 = sbr.rel (0) target = $region25
    $region24: #{tpu_custom_call.1} parent=1 // pred_region
      %55 = dma.done [#allocation4], 256
    $region25: #{tpu_custom_call.1} parent=1 // pred_fallthru
      _
    // Predicated region
    $region26: #{tpu_custom_call.1} parent=1 // pred_check
      _
    $region27: #{tpu_custom_call.1} parent=1 // pred_check_branch
      %57 = sbr.rel (0) target = $region29
    $region28: #{tpu_custom_call.1} parent=1 // pred_region
      %58 = dma.done [#allocation7], 1024
    $region29: #{tpu_custom_call.1} parent=1 // pred_fallthru
      _
    // Predicated region
    $region30: #{tpu_custom_call.1} parent=1 // pred_check
      _
    $region31: #{tpu_custom_call.1} parent=1 // pred_check_branch
      %60 = sbr.rel (0) target = $region33
    $region32: #{tpu_custom_call.1} parent=1 // pred_region
      %61 = dma.done [#allocation7], 1024
    $region33: #{tpu_custom_call.1} parent=1 // pred_fallthru
      _
    %p63 = scmp.eq.s32.totalorder 0, 0
    // Predicated region
    $region34: #{tpu_custom_call.1} parent=1 // pred_check
      %p64 = pneg %p63
    $region35: #{tpu_custom_call.1} parent=1 // pred_check_branch
      %66 = sbr.rel (%p64) target = $region37
    $region36: #{tpu_custom_call.1} parent=1 // pred_region
      %67 = vst [vmem:[#allocation2] sm:$0xff] 0.0
      %68 = vst [vmem:[#allocation2 + $0x8] sm:$0xff] 0.0
    $region37: #{tpu_custom_call.1} parent=1 // pred_fallthru
      _
    %v69 = vld [vmem:[#allocation3] sm:$0xff]
    %v70 = vld [vmem:[#allocation3 + $0x8] sm:$0xff]
    %v71 = vpack.c.bf16 %v70, %v69
    %v72 = vld [vmem:[#allocation6] sm:$0xf]
    %v73 = vld [vmem:[#allocation6 + $0x4] sm:$0xf]
    %v74 = vld [vmem:[#allocation6 + $0x8] sm:$0xf]
    %v75 = vld [vmem:[#allocation6 + $0xc] sm:$0xf]
    %v76 = vld [vmem:[#allocation6 + $0x10] sm:$0xf]
    %v77 = vld [vmem:[#allocation6 + $0x14] sm:$0xf]
    %v78 = vld [vmem:[#allocation6 + $0x18] sm:$0xf]
    %v79 = vld [vmem:[#allocation6 + $0x1c] sm:$0xf]
    %v80 = vld [vmem:[#allocation6 + $0x20] sm:$0xf]
    %v81 = vld [vmem:[#allocation6 + $0x24] sm:$0xf]
    %v82 = vld [vmem:[#allocation6 + $0x28] sm:$0xf]
    %v83 = vld [vmem:[#allocation6 + $0x2c] sm:$0xf]
    %v84 = vld [vmem:[#allocation6 + $0x30] sm:$0xf]
    %v85 = vld [vmem:[#allocation6 + $0x34] sm:$0xf]
    %v86 = vld [vmem:[#allocation6 + $0x38] sm:$0xf]
    %v87 = vld [vmem:[#allocation6 + $0x3c] sm:$0xf]
    %v88 = vld [vmem:[%s2] sm:$0x1]
    %v90 = vlaneseq
    %v91 = vshrl.u32 %v90, 7
    %v92 = vsub.s32 0, %v91
    %v93 = vrot.slane %v88, %v92
    %v111 = vunpack.c.l.b16 %v72
    %v112 = vunpack.c.l.b16 %v73
    %v113 = vunpack.c.l.b16 %v74
    %v114 = vunpack.c.l.b16 %v75
    %v115 = vunpack.c.l.b16 %v76
    %v116 = vunpack.c.l.b16 %v77
    %v117 = vunpack.c.l.b16 %v78
    %v118 = vunpack.c.l.b16 %v79
    %v119 = vunpack.c.l.b16 %v80
    %v120 = vunpack.c.l.b16 %v81
    %v121 = vunpack.c.l.b16 %v82
    %v122 = vunpack.c.l.b16 %v83
    %v123 = vunpack.c.l.b16 %v84
    %v124 = vunpack.c.l.b16 %v85
    %v125 = vunpack.c.l.b16 %v86
    %v126 = vunpack.c.l.b16 %v87
    %v127 = vpack.c.b16 %v112, %v111
    %v128 = vpack.c.b16 %v114, %v113
    %v129 = vpack.c.b16 %v116, %v115
    %v130 = vpack.c.b16 %v118, %v117
    %v131 = vpack.c.b16 %v120, %v119
    %v132 = vpack.c.b16 %v122, %v121
    %v133 = vpack.c.b16 %v124, %v123
    %v134 = vpack.c.b16 %v126, %v125
    %143 = vmatprep.subr.bf16.mxu0 0
    %144 = vmatpush1.bf16.msra.mxu0 %v134
    %145 = vmatprep.subr.bf16.mxu0 0
    %146 = vmatpush1.bf16.msra.mxu0 %v133
    %147 = vmatprep.subr.bf16.mxu0 0
    %148 = vmatpush1.bf16.msra.mxu0 %v132
    %149 = vmatprep.subr.bf16.mxu0 0
    %150 = vmatpush1.bf16.msra.mxu0 %v131
    %151 = vmatprep.subr.bf16.mxu0 0
    %152 = vmatpush1.bf16.msra.mxu0 %v130
    %153 = vmatprep.subr.bf16.mxu0 0
    %154 = vmatpush1.bf16.msra.mxu0 %v129
    %155 = vmatprep.subr.bf16.mxu0 0
    %156 = vmatpush1.bf16.msra.mxu0 %v128
    %157 = vmatprep.subr.bf16.mxu0 0
    %158 = vmatpush1.bf16.msra.mxu0 %v127
    %159 = vmatprep.subr.bf16.mxu0 0
    %160 = vmatpush2.bf16.msra.mxu0 0
    %161 = vmatprep.subr.bf16.mxu0 0
    %162 = vmatpush2.bf16.msra.mxu0 0
    %163 = vmatprep.subr.bf16.mxu0 0
    %164 = vmatpush2.bf16.msra.mxu0 0
    %165 = vmatprep.subr.bf16.mxu0 0
    %166 = vmatpush2.bf16.msra.mxu0 0
    %167 = vmatprep.subr.bf16.mxu0 0
    %168 = vmatpush2.bf16.msra.mxu0 0
    %169 = vmatprep.subr.bf16.mxu0 0
    %170 = vmatpush2.bf16.msra.mxu0 0
    %171 = vmatprep.subr.bf16.mxu0 0
    %172 = vmatpush2.bf16.msra.mxu0 0
    %173 = vmatprep.subr.bf16.mxu0 0
    %174 = vmatpush2.bf16.msra.mxu0 0
    %175 = vmatprep.mubr.bf16.mxu0 0
    %176 = vmatmul.mubr.bf16.gmra.mxu0 %v71
    %v177 = vpop.f32.mrf.mxu0
    %v178 = vadd.f32 %v93, %v177
    %v179 = vpop.f32.mrf.mxu0
    %v180 = vpop.f32.mrf.mxu0
    %v181 = vadd.f32 %v93, %v180
    %v182 = vpop.f32.mrf.mxu0
    %183 = vdwg.mxu0
    %v184 = vmul.f32 %v178, 0.5
    %v185 = vmul.f32 %v181, 0.5
    %v186 = vmul.f32 %v178, 0.044715
    %v187 = vmul.f32 %v181, 0.044715
    %v188 = vmul.f32 %v186, %v178
    %v189 = vmul.f32 %v187, %v181
    %v190 = vmul.f32 %v188, %v178
    %v191 = vmul.f32 %v189, %v181
    %v192 = vadd.f32 %v178, %v190
    %v193 = vadd.f32 %v181, %v191
    %v194 = vmul.f32 %v192, 0.7978846
    %v195 = vmul.f32 %v193, 0.7978846
    %v196 = vtanh.pop %v194
    %v197 = vtanh.pop %v195
    %v198 = vadd.f32 %v196, 1.0
    %v199 = vadd.f32 %v197, 1.0
    %v200 = vmul.f32 %v184, %v198
    %v201 = vmul.f32 %v185, %v199
    %v202 = vld [vmem:[#allocation2] sm:$0xff]
    %v203 = vld [vmem:[#allocation2 + $0x8] sm:$0xff]
    %v204 = vpack.c.bf16 %v201, %v200
    %v205 = vld [vmem:[#allocation8] sm:$0xf]
    %v206 = vld [vmem:[#allocation8 + $0x4] sm:$0xf]
    %v207 = vld [vmem:[#allocation8 + $0x8] sm:$0xf]
    %v208 = vld [vmem:[#allocation8 + $0xc] sm:$0xf]
    %v209 = vld [vmem:[#allocation8 + $0x10] sm:$0xf]
    %v210 = vld [vmem:[#allocation8 + $0x14] sm:$0xf]
    %v211 = vld [vmem:[#allocation8 + $0x18] sm:$0xf]
    %v212 = vld [vmem:[#allocation8 + $0x1c] sm:$0xf]
    %v213 = vld [vmem:[#allocation8 + $0x20] sm:$0xf]
    %v214 = vld [vmem:[#allocation8 + $0x24] sm:$0xf]
    %v215 = vld [vmem:[#allocation8 + $0x28] sm:$0xf]
    %v216 = vld [vmem:[#allocation8 + $0x2c] sm:$0xf]
    %v217 = vld [vmem:[#allocation8 + $0x30] sm:$0xf]
    %v218 = vld [vmem:[#allocation8 + $0x34] sm:$0xf]
    %v219 = vld [vmem:[#allocation8 + $0x38] sm:$0xf]
    %v220 = vld [vmem:[#allocation8 + $0x3c] sm:$0xf]
    %v237 = vunpack.c.l.b16 %v205
    %v238 = vunpack.c.l.b16 %v206
    %v239 = vunpack.c.l.b16 %v207
    %v240 = vunpack.c.l.b16 %v208
    %v241 = vunpack.c.l.b16 %v209
    %v242 = vunpack.c.l.b16 %v210
    %v243 = vunpack.c.l.b16 %v211
    %v244 = vunpack.c.l.b16 %v212
    %v245 = vunpack.c.l.b16 %v213
    %v246 = vunpack.c.l.b16 %v214
    %v247 = vunpack.c.l.b16 %v215
    %v248 = vunpack.c.l.b16 %v216
    %v249 = vunpack.c.l.b16 %v217
    %v250 = vunpack.c.l.b16 %v218
    %v251 = vunpack.c.l.b16 %v219
    %v252 = vunpack.c.l.b16 %v220
    %v253 = vpack.c.b16 %v238, %v237
    %v254 = vpack.c.b16 %v240, %v239
    %v255 = vpack.c.b16 %v242, %v241
    %v256 = vpack.c.b16 %v244, %v243
    %v257 = vpack.c.b16 %v246, %v245
    %v258 = vpack.c.b16 %v248, %v247
    %v259 = vpack.c.b16 %v250, %v249
    %v260 = vpack.c.b16 %v252, %v251
    %269 = vmatprep.subr.bf16.mxu0 0
    %270 = vmatpush1.bf16.msra.mxu0 %v260
    %271 = vmatprep.subr.bf16.mxu0 0
    %272 = vmatpush1.bf16.msra.mxu0 %v259
    %273 = vmatprep.subr.bf16.mxu0 0
    %274 = vmatpush1.bf16.msra.mxu0 %v258
    %275 = vmatprep.subr.bf16.mxu0 0
    %276 = vmatpush1.bf16.msra.mxu0 %v257
    %277 = vmatprep.subr.bf16.mxu0 0
    %278 = vmatpush1.bf16.msra.mxu0 %v256
    %279 = vmatprep.subr.bf16.mxu0 0
    %280 = vmatpush1.bf16.msra.mxu0 %v255
    %281 = vmatprep.subr.bf16.mxu0 0
    %282 = vmatpush1.bf16.msra.mxu0 %v254
    %283 = vmatprep.subr.bf16.mxu0 0
    %284 = vmatpush1.bf16.msra.mxu0 %v253
    %285 = vmatprep.subr.bf16.mxu0 0
    %286 = vmatpush2.bf16.msra.mxu0 0
    %287 = vmatprep.subr.bf16.mxu0 0
    %288 = vmatpush2.bf16.msra.mxu0 0
    %289 = vmatprep.subr.bf16.mxu0 0
    %290 = vmatpush2.bf16.msra.mxu0 0
    %291 = vmatprep.subr.bf16.mxu0 0
    %292 = vmatpush2.bf16.msra.mxu0 0
    %293 = vmatprep.subr.bf16.mxu0 0
    %294 = vmatpush2.bf16.msra.mxu0 0
    %295 = vmatprep.subr.bf16.mxu0 0
    %296 = vmatpush2.bf16.msra.mxu0 0
    %297 = vmatprep.subr.bf16.mxu0 0
    %298 = vmatpush2.bf16.msra.mxu0 0
    %299 = vmatprep.subr.bf16.mxu0 0
    %300 = vmatpush2.bf16.msra.mxu0 0
    %301 = vmatprep.mubr.bf16.mxu0 0
    %302 = vmatmul.mubr.bf16.gmra.mxu0 %v204
    %v303 = vpop.f32.mrf.mxu0
    %v304 = vadd.f32 0.0, %v303
    %v305 = vpop.f32.mrf.mxu0
    %v306 = vpop.f32.mrf.mxu0
    %v307 = vadd.f32 0.0, %v306
    %v308 = vpop.f32.mrf.mxu0
    %309 = vdwg.mxu0
    %v310 = vadd.f32 %v202, %v304
    %v311 = vadd.f32 %v203, %v307
    %312 = vst [vmem:[#allocation2] sm:$0xff] %v310
    %313 = vst [vmem:[#allocation2 + $0x8] sm:$0xff] %v311
    // Predicated region
    $region38: #{tpu_custom_call.1} parent=1 // pred_check
      %p314 = pneg %p63
    $region39: #{tpu_custom_call.1} parent=1 // pred_check_branch
      %316 = sbr.rel (%p314) target = $region41
    $region40: #{tpu_custom_call.1} parent=1 // pred_region
      %v317 = vld [vmem:[#allocation2] sm:$0xff]
      %v318 = vld [vmem:[#allocation2 + $0x8] sm:$0xff]
      %v319 = vld [vmem:[%s4] sm:$0x1]
      %v321 = vlaneseq
      %v322 = vshrl.u32 %v321, 7
      %v323 = vsub.s32 0, %v322
      %v324 = vrot.slane %v319, %v323
      %v326 = vadd.f32 %v317, %v324
      %v327 = vadd.f32 %v318, %v324
      %328 = vst [vmem:[#allocation9] sm:$0xff] %v326
      %329 = vst [vmem:[#allocation9 + $0x8] sm:$0xff] %v327
    $region41: #{tpu_custom_call.1} parent=1 // pred_fallthru
      _
    // Predicated region
    $region42: #{tpu_custom_call.1} parent=1 // pred_check
      _
    $region43: #{tpu_custom_call.1} parent=1 // pred_check_branch
      %331 = sbr.rel (0) target = $region45
    $region44: #{tpu_custom_call.1} parent=1 // pred_region
      %s333 = ssub.s32 256, 256
      %334 = vsyncadd [#allocation5], %s333
      %s335 = sshll.u32 [#allocation9], 4
      %s336 = int_to_ptr.vmem [resolvable:$true] %s335
      %341 = dma.vmem_to_hbm [thread:$0]  %s336, 256, %s5, [#allocation5], 128, 128, 8
    $region45: #{tpu_custom_call.1} parent=1 // pred_fallthru
      _
    // Predicated region
    $region46: #{tpu_custom_call.1} parent=1 // pred_check
      _
    $region47: #{tpu_custom_call.1} parent=1 // pred_check_branch
      %343 = sbr.rel (0) target = $region49
    $region48: #{tpu_custom_call.1} parent=1 // pred_region
      %344 = dma.done [#allocation5], 256
    $region49: #{tpu_custom_call.1} parent=1 // pred_fallthru
      _
    %345 = vsyncpa [#allocation4], 1
    %346 = vsyncpa [#allocation7], 1
    %347 = vsyncpa [#allocation5], 1

</llo_original>
